<compile_context>
chip_gen: v7x
topology: tpu7x:2x2x1
jax: 0.10.0
libtpu: 0.0.40
codegen_flags: <defaults>
</compile_context>

<pallas_src>
import jax
import jax.numpy as jnp
from jax.experimental import pallas as pl
from jax.experimental.pallas import tpu as pltpu


def _instance_encoder_kernel(claim_ref, ev_ref, meta_ref, out_ref):
    c = claim_ref[...]                          # (Bt, H)
    e = ev_ref[...]                             # (Bt, H)
    m = meta_ref[...].astype(out_ref.dtype)     # (Bt, M)

    # Per-row dot product: VPU multiply + XLU lane reduce.
    dot = jnp.sum(c * e, axis=-1, keepdims=True)            # (Bt, 1)

    # Build the whole output row once and do a single store per tile.
    row = jnp.concatenate((c, e, c - e, dot, m), axis=-1)    # (Bt, 3H+1+M)
    out_ref[...] = row.astype(out_ref.dtype)


def instance_encoder_batched(claim, evidence, metadata):
    """Batched Pallas encoder: (B, H), (B, H), (B, M) -> (B, 3H + 1 + M)."""
    assert claim.ndim == 2 and evidence.shape == claim.shape
    assert metadata.ndim == 2 and metadata.shape[0] == claim.shape[0]

    B, H = claim.shape
    M = metadata.shape[1]
    out_len = 3 * H + 1 + M

    # Big batch tiles amortize per-step overhead.  1024 rows keeps every
    # buffer (in + out, double-buffered) under ~2 MiB of VMEM.
    bt = B if B <= 1024 else 1024               # B<=1024 -> full dim; else mult. of 8
    grid = (pl.cdiv(B, bt),)

    return pl.pallas_call(
        _instance_encoder_kernel,
        out_shape=jax.ShapeDtypeStruct((B, out_len), claim.dtype),
        grid=grid,
        in_specs=[
            pl.BlockSpec((bt, H), lambda i: (i, 0)),
            pl.BlockSpec((bt, H), lambda i: (i, 0)),
            pl.BlockSpec((bt, M), lambda i: (i, 0)),
        ],
        out_specs=pl.BlockSpec((bt, out_len), lambda i: (i, 0)),
        compiler_params=pltpu.CompilerParams(
            dimension_semantics=("parallel",),   # let v7x's 2 TCs split the batch
        ),
    )(claim, evidence, metadata)


def instance_encoder(claim_encoding, evidence_encoding, metadata_encoding):
    """Exact equivalent of instanceEncoder.forward for 1-D inputs."""
    assert claim_encoding.ndim == 1 and evidence_encoding.ndim == 1
    assert claim_encoding.shape == evidence_encoding.shape
    assert metadata_encoding.ndim == 1
    out = instance_encoder_batched(
        claim_encoding[None, :],
        evidence_encoding[None, :],
        metadata_encoding[None, :],
    )
    return out[0]


if __name__ == "__main__":
    # instanceEncoder has no learnable parameters (empty __init__),
    # so only deterministic example inputs are needed.
    H = 32   # claim / evidence encoding size
    M = 8    # metadata encoding size
    B = 16   # small batch to exercise the batched/tiled path

    key = jax.random.PRNGKey(0)
    k_claim, k_ev, k_meta = jax.random.split(key, 3)
    claim_b = jax.random.normal(k_claim, (B, H), dtype=jnp.float32)
    evidence_b = jax.random.normal(k_ev, (B, H), dtype=jnp.float32)
    metadata_b = jax.random.normal(k_meta, (B, M), dtype=jnp.float32)

    # --- single-instance path (matches torch forward exactly) ---
    claim, evidence, metadata = claim_b[0], evidence_b[0], metadata_b[0]
    out1 = jax.block_until_ready(instance_encoder(claim, evidence, metadata))
    ref1 = jnp.concatenate(
        (claim, evidence, claim - evidence, jnp.dot(claim, evidence)[None], metadata)
    )
    assert out1.shape == (3 * H + 1 + M,)
    if not jnp.allclose(out1, ref1, rtol=1e-5, atol=1e-5):
        raise AssertionError("Pallas kernel (single instance) does not match reference")

    # --- batched path (the optimized form) ---
    out_b = jax.block_until_ready(
        instance_encoder_batched(claim_b, evidence_b, metadata_b)
    )
    ref_b = jnp.concatenate(
        (
            claim_b,
            evidence_b,
            claim_b - evidence_b,
            jnp.sum(claim_b * evidence_b, axis=-1, keepdims=True),
            metadata_b,
        ),
        axis=-1,
    )
    assert out_b.shape == (B, 3 * H + 1 + M)
    if not jnp.allclose(out_b, ref_b, rtol=1e-5, atol=1e-5):
        raise AssertionError("Pallas kernel (batched) does not match reference")

    print("KERNEL_OK")
</pallas_src>

<mosaic_0001>
module attributes {stable_mosaic.version = 11 : i64} {
  func.func @_instance_encoder_kernel(%arg0: i32, %arg1: memref<1x32xf32, #tpu.memory_space<vmem>>, %arg2: memref<1x32xf32, #tpu.memory_space<vmem>>, %arg3: memref<1x8xf32, #tpu.memory_space<vmem>>, %arg4: memref<1x105xf32, #tpu.memory_space<vmem>>) attributes {dimension_semantics = [#tpu.dimension_semantics<parallel>], iteration_bounds = array<i64: 1>, scalar_prefetch = 0 : i64, scratch_operands = 0 : i64, tpu.core_type = #tpu.core_type<tc>, window_params = [{transform_indices = @transform_0, window_bounds = array<i64: 1, 32>}, {transform_indices = @transform_1, window_bounds = array<i64: 1, 32>}, {transform_indices = @transform_2, window_bounds = array<i64: 1, 8>}, {transform_indices = @transform_3, window_bounds = array<i64: 1, 105>}]} {
    %c0 = arith.constant 0 : index
    %c0_0 = arith.constant 0 : index
    %0 = vector.load %arg1[%c0, %c0_0] : memref<1x32xf32, #tpu.memory_space<vmem>>, vector<1x32xf32>
    %c0_1 = arith.constant 0 : index
    %c0_2 = arith.constant 0 : index
    %1 = vector.load %arg2[%c0_1, %c0_2] : memref<1x32xf32, #tpu.memory_space<vmem>>, vector<1x32xf32>
    %c0_3 = arith.constant 0 : index
    %c0_4 = arith.constant 0 : index
    %2 = vector.load %arg3[%c0_3, %c0_4] : memref<1x8xf32, #tpu.memory_space<vmem>>, vector<1x8xf32>
    %3 = arith.mulf %0, %1 : vector<1x32xf32>
    %cst = arith.constant dense<0.000000e+00> : vector<1xf32>
    %4 = vector.multi_reduction <add>, %3, %cst [1] : vector<1x32xf32> to vector<1xf32>
    %5 = vector.shape_cast %4 : vector<1xf32> to vector<1x1xf32>
    %6 = arith.subf %0, %1 : vector<1x32xf32>
    %7 = tpu.concatenate %0, %1, %6, %5, %2 in 1 : vector<1x32xf32>, vector<1x32xf32>, vector<1x32xf32>, vector<1x1xf32>, vector<1x8xf32> -> vector<1x105xf32>
    %c0_5 = arith.constant 0 : index
    %c0_6 = arith.constant 0 : index
    %8 = vector.load %arg4[%c0_5, %c0_6] : memref<1x105xf32, #tpu.memory_space<vmem>>, vector<1x105xf32>
    tpu.vector_store %arg4[%c0_5, %c0_6], %7 {strides = array<i32>} : memref<1x105xf32, #tpu.memory_space<vmem>>, vector<1x105xf32>,
    return
  }
  func.func @transform_0(%arg0: i32) -> (i32, i32) {
    %c0_i32 = arith.constant 0 : i32
    %c0_i32_0 = arith.constant 0 : i32
    return %arg0, %c0_i32 : i32, i32
  }
  func.func @transform_1(%arg0: i32) -> (i32, i32) {
    %c0_i32 = arith.constant 0 : i32
    %c0_i32_0 = arith.constant 0 : i32
    return %arg0, %c0_i32 : i32, i32
  }
  func.func @transform_2(%arg0: i32) -> (i32, i32) {
    %c0_i32 = arith.constant 0 : i32
    %c0_i32_0 = arith.constant 0 : i32
    return %arg0, %c0_i32 : i32, i32
  }
  func.func @transform_3(%arg0: i32) -> (i32, i32) {
    %c0_i32 = arith.constant 0 : i32
    %c0_i32_0 = arith.constant 0 : i32
    return %arg0, %c0_i32 : i32, i32
  }
}

</mosaic_0001>

<llo_original>
// kernel: tpu_custom_call.1
$region0: #{tpu_custom_call.1}
  #allocation0 [shape = 'u32[]', space=smem, size = 0x4, offset = 0x4, fixed_abs, tag = 'smem constant byte address 0x4 - core index']
  #allocation1 [shape = 'u32[144,128]{1,0:T(1,128)}', space=vmem, size = 0x12000, scoped, tag = 'internal scratch']
  %s0 = inlined_call_operand.hbm [shape: f32[1,32], index: 0, kind: input, shape index: {}]
  %s1 = inlined_call_operand.vmem [shape: f32[1,32], index: 1, kind: input, shape index: {}]
  %s2 = inlined_call_operand.vmem [shape: f32[1,8], index: 2, kind: input, shape index: {}]
  %s3 = inlined_call_operand.hbm [shape: f32[1,105], index: 3, kind: output, shape index: {}]
  %s4 = sld [smem:[#allocation0]]
  $region26: #{tpu_custom_call.1} parent=0
    _
  %s6 = ssub.s32 1, %s4
  %s7 = scalar_select 0, %s6, %s4
  $region1: #{tpu_custom_call.1} parent=0
    #allocation2 [shape = 'u8[512]{0}', space=vmem, size = 0x400, scoped, tag = 'input window, operand 0, single buffered']
    #allocation3 [shape = 's32[1]{0}', space=sflag, size = 0x4, scoped, tag = 'scoped memory for tpu_custom_call.1']
    #allocation4 [shape = 's32[1]{0}', space=sflag, size = 0x4, scoped, tag = 'scoped memory for tpu_custom_call.1']
    #allocation5 [shape = 'u8[512]{0}', space=vmem, size = 0x400, scoped, tag = 'output window, operand 0, single buffered']
    %8 = vsyncpa [#allocation3], 0
    %9 = vsyncpa [#allocation4], 0
    // Predicated region
    $region2: #{tpu_custom_call.1} parent=1 // pred_check
      _
    $region3: #{tpu_custom_call.1} parent=1 // pred_check_branch
      %11 = sbr.rel (0) target = $region5
    $region4: #{tpu_custom_call.1} parent=1 // pred_region
      %s13 = ssub.s32 16, 16
      %14 = vsyncadd [#allocation3], %s13
      %s16 = sshll.u32 [#allocation2], 4
      %s17 = int_to_ptr.vmem [resolvable:$true] %s16
      %19 = dma.hbm_to_vmem [thread:$0]  %s0, 16, %s17, [#allocation3]
    $region5: #{tpu_custom_call.1} parent=1 // pred_fallthru
      _
    // Predicated region
    $region6: #{tpu_custom_call.1} parent=1 // pred_check
      _
    $region7: #{tpu_custom_call.1} parent=1 // pred_check_branch
      %21 = sbr.rel (0) target = $region9
    $region8: #{tpu_custom_call.1} parent=1 // pred_region
      _
    $region9: #{tpu_custom_call.1} parent=1 // pred_fallthru
      _
    // Predicated region
    $region10: #{tpu_custom_call.1} parent=1 // pred_check
      _
    $region11: #{tpu_custom_call.1} parent=1 // pred_check_branch
      %23 = sbr.rel (0) target = $region13
    $region12: #{tpu_custom_call.1} parent=1 // pred_region
      _
    $region13: #{tpu_custom_call.1} parent=1 // pred_fallthru
      _
    // Predicated region
    $region14: #{tpu_custom_call.1} parent=1 // pred_check
      _
    $region15: #{tpu_custom_call.1} parent=1 // pred_check_branch
      %25 = sbr.rel (0) target = $region17
    $region16: #{tpu_custom_call.1} parent=1 // pred_region
      %26 = dma.done [#allocation3], 16
    $region17: #{tpu_custom_call.1} parent=1 // pred_fallthru
      _
    %v27 = vld [vmem:[#allocation2] sm:$0x1]
    %v28 = vld [vmem:[%s1] sm:$0x1]
    %v29 = vld [vmem:[%s2] sm:$0x1]
    %v30 = vmul.f32 %v27, %v28
    %vm31 = vcmask 253952
    %v32 = vsel %vm31, %v30, 0.0
    %33 = vadd.xlane.f32.xlu0 %v32
    %v34 = vpop.xlane.xlu0 %33
    %v35 = vsub.f32 %v27, %v28
    %v37 = vlaneseq
    %v38 = vshrl.u32 %v37, 7
    %v39 = vsub.s32 0, %v38
    %v40 = vrot.slane %v28, %v39
    %41 = vrot.lane.b32.xlu0 %v40, 32
    %v42 = vpop.permute.xlu0 %41
    %v45 = vlaneseq
    %v46 = vshrl.u32 %v45, 7
    %v47 = vsub.s32 0, %v46
    %v48 = vrot.slane %v35, %v47
    %49 = vrot.lane.b32.xlu0 %v48, 64
    %v50 = vpop.permute.xlu0 %49
    %v53 = vlaneseq
    %v54 = vshrl.u32 %v53, 7
    %v55 = vsub.s32 0, %v54
    %v56 = vrot.slane %v29, %v55
    %57 = vrot.lane.b32.xlu0 %v56, 97
    %v58 = vpop.permute.xlu0 %57
    %vm60 = vcmask 261120
    %v61 = vsel %vm60, %v27, %v42
    %vm62 = vcmask 523264
    %v63 = vsel %vm62, %v61, %v50
    %vm64 = vcmask 785408
    %v65 = vsel %vm64, %v63, %v34
    %vm66 = vcmask 793600
    %v67 = vsel %vm66, %v65, %v58
    %vm68 = vcmask 851968
    %69 = vst.msk [vmem:[#allocation5] sm:$0x1] %vm68, %v67
    // Predicated region
    $region18: #{tpu_custom_call.1} parent=1 // pred_check
      _
    $region19: #{tpu_custom_call.1} parent=1 // pred_check_branch
      %71 = sbr.rel (0) target = $region21
    $region20: #{tpu_custom_call.1} parent=1 // pred_region
      %s73 = ssub.s32 16, 16
      %74 = vsyncadd [#allocation4], %s73
      %s76 = sshll.u32 [#allocation5], 4
      %s77 = int_to_ptr.vmem [resolvable:$true] %s76
      %79 = dma.vmem_to_hbm [thread:$0]  %s77, 16, %s3, [#allocation4]
    $region21: #{tpu_custom_call.1} parent=1 // pred_fallthru
      _
    // Predicated region
    $region22: #{tpu_custom_call.1} parent=1 // pred_check
      _
    $region23: #{tpu_custom_call.1} parent=1 // pred_check_branch
      %81 = sbr.rel (0) target = $region25
    $region24: #{tpu_custom_call.1} parent=1 // pred_region
      %82 = dma.done [#allocation4], 16
    $region25: #{tpu_custom_call.1} parent=1 // pred_fallthru
      _
    %83 = vsyncpa [#allocation3], 1
    %84 = vsyncpa [#allocation4], 1

</llo_original>
